<compile_context>
chip_gen: v7x
topology: tpu7x:2x2x1
jax: 0.10.0
libtpu: 0.0.40
codegen_flags: <defaults>
</compile_context>

<pallas_src>
import jax
import jax.numpy as jnp
from jax import lax
from jax.experimental import pallas as pl
from jax.experimental.pallas import tpu as pltpu


def _gather2d_kernel(x_ref, y_ref, im_ref, out_ref):
    # x_ref, y_ref: (1, TN) int32 lane-dense keypoint coordinates for this tile
    # im_ref:       (H, W)  resident image slab (im[0, 0])
    # out_ref:      (1, TN) lane-dense gathered values
    h, w = im_ref.shape
    tn = out_ref.shape[1]

    im = im_ref[...]

    # Stage 1 (MXU): column select. cols[h, n] = im[h, x[n]]
    lane_w = lax.broadcasted_iota(jnp.int32, (w, tn), 0)               # (W, TN)
    onehot_x = (lane_w == x_ref[...]).astype(im.dtype)                 # exact 0/1 one-hot
    cols = jnp.dot(im, onehot_x, preferred_element_type=jnp.float32)   # (H, TN)

    # Stage 2 (VPU + sublane reduce): row select. out[n] = cols[y[n], n]
    sub_h = lax.broadcasted_iota(jnp.int32, (h, tn), 0)                # (H, TN)
    onehot_y = (sub_h == y_ref[...]).astype(cols.dtype)                # (H, TN)
    vals = jnp.sum(cols * onehot_y, axis=0, keepdims=True)             # (1, TN), exact

    out_ref[...] = vals.astype(out_ref.dtype)


def _pick_tile_n(n: int) -> int:
    # Bigger tiles amortize per-grid-step overhead and feed the MXU wider N;
    # smaller tiles avoid padding waste for small keypoint counts.
    if n >= 512:
        return 512
    if n >= 256:
        return 256
    return 128


def gather2d(kpts, im, *, tile_n: int | None = None):
    """Pallas implementation of moai Gather2d.forward."""
    if kpts.shape[-1] > 2:
        kpts = kpts[..., :2]
    if im.ndim <= 3:
        im = im[None]
    b, c, h, w = im.shape

    kpts_flat = kpts.reshape(-1, 2)                                    # (N, 2)
    n = kpts_flat.shape[0]

    if tile_n is None:
        tile_n = _pick_tile_n(n)
    assert tile_n % 128 == 0, "tile_n must be a multiple of 128 (lane width)"

    # Integer index math (cast x, y to int32; matches .long() for the integer-valued
    # coordinates this module expects).
    x = kpts_flat[:, 0].astype(jnp.int32)
    y = kpts_flat[:, 1].astype(jnp.int32)

    # Pad keypoint count to a multiple of the tile; padded lanes use coord (0, 0)
    # (a valid index) and are sliced off below.
    n_pad = tile_n * pl.cdiv(n, tile_n)
    x = jnp.pad(x, (0, n_pad - n)).reshape(1, n_pad)
    y = jnp.pad(y, (0, n_pad - n)).reshape(1, n_pad)

    # Gather index has size-1 batch & channel dims -> only im[0, 0] is ever read.
    im00 = im[0, 0]                                                    # (H, W)

    # Rough VMEM budget: image slab (double-buffered by the pipeline) + per-tile
    # f32 intermediates (onehot_x, cols, onehot_y) + the tiny x/y/out tiles.
    itemsize = jnp.dtype(im.dtype).itemsize
    est_vmem = (
        2 * h * w * itemsize                 # resident image slab (x2 for buffering)
        + (2 * h + w) * tile_n * 4           # onehot_y, cols, onehot_x intermediates
        + 6 * tile_n * 4                     # x / y / out tiles, double-buffered
    )
    vmem_limit = min(100 * 1024 * 1024, max(32 * 1024 * 1024, int(est_vmem * 2)))

    grid = (n_pad // tile_n,)
    out = pl.pallas_call(
        _gather2d_kernel,
        out_shape=jax.ShapeDtypeStruct((1, n_pad), im.dtype),
        grid=grid,
        in_specs=[
            pl.BlockSpec((1, tile_n), lambda i: (0, i)),               # x coords (lane-dense)
            pl.BlockSpec((1, tile_n), lambda i: (0, i)),               # y coords (lane-dense)
            pl.BlockSpec((h, w), lambda i: (0, 0)),                    # resident image slab
        ],
        out_specs=pl.BlockSpec((1, tile_n), lambda i: (0, i)),         # lane-dense output
        compiler_params=pltpu.CompilerParams(
            dimension_semantics=("parallel",),                         # shard tiles across TCs
            vmem_limit_bytes=vmem_limit,
        ),
    )(x, y, im00)

    return out[:, :n].reshape(1, 1, n)                                 # torch output (1, 1, N)


if __name__ == "__main__":
    key = jax.random.PRNGKey(0)
    k_im, k_x, k_y, k_junk = jax.random.split(key, 4)

    b, c, h, w = 2, 4, 16, 16
    im = jax.random.normal(k_im, (b, c, h, w), dtype=jnp.float32)

    # kpts with a trailing extra coordinate to exercise the [..., :2] slice.
    n_kpts = 8
    xs = jax.random.randint(k_x, (b, n_kpts, 1), 0, w, dtype=jnp.int32)
    ys = jax.random.randint(k_y, (b, n_kpts, 1), 0, h, dtype=jnp.int32)
    junk = jax.random.randint(k_junk, (b, n_kpts, 1), 0, 100, dtype=jnp.int32)
    kpts = jnp.concatenate([xs, ys, junk], axis=-1)                    # (2, 8, 3)

    out = gather2d(kpts, im)
    out = jax.block_until_ready(out)

    # Pure-JAX reference for sanity.
    kf = kpts[..., :2].reshape(-1, 2)
    idx = w * kf[:, 1] + kf[:, 0]
    ref = im[0, 0].reshape(-1)[idx].reshape(1, 1, -1)
    assert out.shape == (1, 1, b * n_kpts), out.shape
    assert jnp.allclose(out, ref), "mismatch vs reference"

    print("KERNEL_OK")
</pallas_src>

<mosaic_0001>
module attributes {stable_mosaic.version = 11 : i64} {
  func.func @_gather2d_kernel(%arg0: i32, %arg1: memref<1x128xi32, #tpu.memory_space<vmem>>, %arg2: memref<1x128xi32, #tpu.memory_space<vmem>>, %arg3: memref<16x16xf32, #tpu.memory_space<vmem>>, %arg4: memref<1x128xf32, #tpu.memory_space<vmem>>) attributes {dimension_semantics = [#tpu.dimension_semantics<parallel>], iteration_bounds = array<i64: 1>, scalar_prefetch = 0 : i64, scratch_operands = 0 : i64, tpu.core_type = #tpu.core_type<tc>, window_params = [{transform_indices = @transform_0, window_bounds = array<i64: 1, 128>}, {transform_indices = @transform_1, window_bounds = array<i64: 1, 128>}, {pipeline_mode = #tpu.pipeline_mode<synchronous>, transform_indices = @transform_2, window_bounds = array<i64: 16, 16>}, {transform_indices = @transform_3, window_bounds = array<i64: 1, 128>}]} {
    %c0 = arith.constant 0 : index
    %c0_0 = arith.constant 0 : index
    %0 = vector.load %arg3[%c0, %c0_0] : memref<16x16xf32, #tpu.memory_space<vmem>>, vector<16x16xf32>
    %1 = tpu.iota {dimensions = array<i32: 0>} : vector<16x128xi32>
    %c0_1 = arith.constant 0 : index
    %c0_2 = arith.constant 0 : index
    %2 = vector.load %arg1[%c0_1, %c0_2] : memref<1x128xi32, #tpu.memory_space<vmem>>, vector<1x128xi32>
    %3 = vector.broadcast %2 : vector<1x128xi32> to vector<16x128xi32>
    %4 = arith.cmpi eq, %1, %3 : vector<16x128xi32>
    %5 = arith.extui %4 : vector<16x128xi1> to vector<16x128xi32>
    %6 = arith.sitofp %5 : vector<16x128xi32> to vector<16x128xf32>
    %cst = arith.constant dense<0.000000e+00> : vector<16x128xf32>
    %7 = tpu.matmul %0, %6, %cst {dimension_numbers = #tpu.dot_dimension_numbers<[1], [0], [0], [1], [0, 0, 1, 1], [], []>} : vector<16x16xf32>, vector<16x128xf32>, vector<16x128xf32> -> vector<16x128xf32>
    %8 = tpu.iota {dimensions = array<i32: 0>} : vector<16x128xi32>
    %c0_3 = arith.constant 0 : index
    %c0_4 = arith.constant 0 : index
    %9 = vector.load %arg2[%c0_3, %c0_4] : memref<1x128xi32, #tpu.memory_space<vmem>>, vector<1x128xi32>
    %10 = vector.broadcast %9 : vector<1x128xi32> to vector<16x128xi32>
    %11 = arith.cmpi eq, %8, %10 : vector<16x128xi32>
    %12 = arith.extui %11 : vector<16x128xi1> to vector<16x128xi32>
    %13 = arith.sitofp %12 : vector<16x128xi32> to vector<16x128xf32>
    %14 = arith.mulf %7, %13 : vector<16x128xf32>
    %cst_5 = arith.constant dense<0.000000e+00> : vector<128xf32>
    %15 = vector.multi_reduction <add>, %14, %cst_5 [0] : vector<16x128xf32> to vector<128xf32>
    %16 = vector.shape_cast %15 : vector<128xf32> to vector<1x128xf32>
    %c0_6 = arith.constant 0 : index
    %c0_7 = arith.constant 0 : index
    %17 = vector.load %arg4[%c0_6, %c0_7] : memref<1x128xf32, #tpu.memory_space<vmem>>, vector<1x128xf32>
    tpu.vector_store %arg4[%c0_6, %c0_7], %16 {strides = array<i32>} : memref<1x128xf32, #tpu.memory_space<vmem>>, vector<1x128xf32>,
    return
  }
  func.func @transform_0(%arg0: i32) -> (i32, i32) {
    %c0_i32 = arith.constant 0 : i32
    %c0_i32_0 = arith.constant 0 : i32
    return %c0_i32, %arg0 : i32, i32
  }
  func.func @transform_1(%arg0: i32) -> (i32, i32) {
    %c0_i32 = arith.constant 0 : i32
    %c0_i32_0 = arith.constant 0 : i32
    return %c0_i32, %arg0 : i32, i32
  }
  func.func @transform_2(%arg0: i32) -> (i32, i32) {
    %c0_i32 = arith.constant 0 : i32
    %c0_i32_0 = arith.constant 0 : i32
    %c0_i32_1 = arith.constant 0 : i32
    return %c0_i32, %c0_i32_0 : i32, i32
  }
  func.func @transform_3(%arg0: i32) -> (i32, i32) {
    %c0_i32 = arith.constant 0 : i32
    %c0_i32_0 = arith.constant 0 : i32
    return %c0_i32, %arg0 : i32, i32
  }
}

</mosaic_0001>

<llo_original>
// kernel: tpu_custom_call.1
$region0: #{tpu_custom_call.1}
  #allocation0 [shape = 'u32[]', space=smem, size = 0x4, offset = 0x4, fixed_abs, tag = 'smem constant byte address 0x4 - core index']
  #allocation1 [shape = 'u32[144,128]{1,0:T(1,128)}', space=vmem, size = 0x12000, scoped, tag = 'internal scratch']
  %s0 = inlined_call_operand.hbm [shape: s32[1,128], index: 0, kind: input, shape index: {}]
  %s1 = inlined_call_operand.vmem [shape: s32[1,128], index: 1, kind: input, shape index: {}]
  %s2 = inlined_call_operand.hbm [shape: f32[16,16], index: 2, kind: input, shape index: {}]
  %s3 = inlined_call_operand.hbm [shape: f32[1,128], index: 3, kind: output, shape index: {}]
  %s4 = sld [smem:[#allocation0]]
  $region30: #{tpu_custom_call.1} parent=0
    _
  %s6 = ssub.s32 1, %s4
  %s7 = scalar_select 0, %s6, %s4
  $region1: #{tpu_custom_call.1} parent=0
    #allocation2 [shape = 'u8[512]{0}', space=vmem, size = 0x400, scoped, tag = 'input window, operand 0, single buffered']
    #allocation3 [shape = 's32[1]{0}', space=sflag, size = 0x4, scoped, tag = 'scoped memory for tpu_custom_call.1']
    #allocation4 [shape = 's32[1]{0}', space=sflag, size = 0x4, scoped, tag = 'scoped memory for tpu_custom_call.1']
    #allocation5 [shape = 'u8[8192]{0}', space=vmem, size = 0x2000, scoped, tag = 'input window, operand 2, single buffered']
    #allocation6 [shape = 's32[1]{0}', space=sflag, size = 0x4, scoped, tag = 'scoped memory for tpu_custom_call.1']
    #allocation7 [shape = 'u8[512]{0}', space=vmem, size = 0x400, scoped, tag = 'output window, operand 0, single buffered']
    %8 = vsyncpa [#allocation3], 0
    %9 = vsyncpa [#allocation6], 0
    %10 = vsyncpa [#allocation4], 0
    // Predicated region
    $region2: #{tpu_custom_call.1} parent=1 // pred_check
      _
    $region3: #{tpu_custom_call.1} parent=1 // pred_check_branch
      %12 = sbr.rel (0) target = $region5
    $region4: #{tpu_custom_call.1} parent=1 // pred_region
      %s14 = ssub.s32 16, 16
      %15 = vsyncadd [#allocation3], %s14
      %s17 = sshll.u32 [#allocation2], 4
      %s18 = int_to_ptr.vmem [resolvable:$true] %s17
      %20 = dma.hbm_to_vmem [thread:$0]  %s0, 16, %s18, [#allocation3]
    $region5: #{tpu_custom_call.1} parent=1 // pred_fallthru
      _
    // Predicated region
    $region6: #{tpu_custom_call.1} parent=1 // pred_check
      _
    $region7: #{tpu_custom_call.1} parent=1 // pred_check_branch
      %22 = sbr.rel (0) target = $region9
    $region8: #{tpu_custom_call.1} parent=1 // pred_region
      _
    $region9: #{tpu_custom_call.1} parent=1 // pred_fallthru
      _
    // Predicated region
    $region10: #{tpu_custom_call.1} parent=1 // pred_check
      _
    $region11: #{tpu_custom_call.1} parent=1 // pred_check_branch
      %24 = sbr.rel (0) target = $region13
    $region12: #{tpu_custom_call.1} parent=1 // pred_region
      %s26 = ssub.s32 256, 256
      %27 = vsyncadd [#allocation6], %s26
      %s28 = sshll.u32 [#allocation5], 4
      %s29 = int_to_ptr.vmem [resolvable:$true] %s28
      %34 = dma.hbm_to_vmem [thread:$0]  %s2, 256, %s29, [#allocation6], 128, 128, 8
    $region13: #{tpu_custom_call.1} parent=1 // pred_fallthru
      _
    // Predicated region
    $region14: #{tpu_custom_call.1} parent=1 // pred_check
      _
    $region15: #{tpu_custom_call.1} parent=1 // pred_check_branch
      %36 = sbr.rel (0) target = $region17
    $region16: #{tpu_custom_call.1} parent=1 // pred_region
      %37 = dma.done [#allocation3], 16
    $region17: #{tpu_custom_call.1} parent=1 // pred_fallthru
      _
    // Predicated region
    $region18: #{tpu_custom_call.1} parent=1 // pred_check
      _
    $region19: #{tpu_custom_call.1} parent=1 // pred_check_branch
      %39 = sbr.rel (0) target = $region21
    $region20: #{tpu_custom_call.1} parent=1 // pred_region
      %40 = dma.done [#allocation6], 256
    $region21: #{tpu_custom_call.1} parent=1 // pred_fallthru
      _
    %v41 = vld [vmem:[#allocation5] sm:$0xff]
    %v42 = vld [vmem:[#allocation5 + $0x8] sm:$0xff]
    %v43 = vlaneseq
    %v44 = vshrl.u32 %v43, 7
    %v45 = vadd.s32 %v44, 8
    %v46 = vld [vmem:[#allocation2] sm:$0x1]
    %v47 = vlaneseq
    %v48 = vshrl.u32 %v47, 7
    %v49 = vsub.s32 0, %v48
    %v50 = vrot.slane %v46, %v49
    %vm51 = vcmp.eq.s32.totalorder %v44, %v50
    %vm52 = vcmp.eq.s32.totalorder %v45, %v50
    %v53 = vsel %vm51, 1, 0
    %v54 = vsel %vm52, 1, 0
    %v55 = vcvt.s32.f32 %v53
    %v56 = vcvt.s32.f32 %v54
    %vm57 = vcmask 130048
    %v59 = vsel %vm57, %v41, 0
    %v62 = vsel %vm57, %v42, 0
    %64 = vmatprep.subr.mxu0 0.0
    %65 = vmatpush1.msra.mxu0 %v55
    %66 = vmatprep.subr.mxu0 0.0
    %67 = vmatpush1.msra.mxu0 %v56
    %68 = vmatprep.subr.mxu0 0.0
    %69 = vmatpush1.msra.mxu0 0.0
    %70 = vmatprep.subr.mxu0 0.0
    %71 = vmatpush1.msra.mxu0 0.0
    %72 = vmatprep.subr.mxu0 0.0
    %73 = vmatpush1.msra.mxu0 0.0
    %74 = vmatprep.subr.mxu0 0.0
    %75 = vmatpush1.msra.mxu0 0.0
    %76 = vmatprep.subr.mxu0 0.0
    %77 = vmatpush1.msra.mxu0 0.0
    %78 = vmatprep.subr.mxu0 0.0
    %79 = vmatpush1.msra.mxu0 0.0
    %80 = vmatprep.subr.mxu0 0.0
    %81 = vmatpush1.msra.mxu0 0.0
    %82 = vmatprep.subr.mxu0 0.0
    %83 = vmatpush1.msra.mxu0 0.0
    %84 = vmatprep.subr.mxu0 0.0
    %85 = vmatpush1.msra.mxu0 0.0
    %86 = vmatprep.subr.mxu0 0.0
    %87 = vmatpush1.msra.mxu0 0.0
    %88 = vmatprep.subr.mxu0 0.0
    %89 = vmatpush1.msra.mxu0 0.0
    %90 = vmatprep.subr.mxu0 0.0
    %91 = vmatpush1.msra.mxu0 0.0
    %92 = vmatprep.subr.mxu0 0.0
    %93 = vmatpush1.msra.mxu0 0.0
    %94 = vmatprep.subr.mxu0 0.0
    %95 = vmatpush1.msra.mxu0 0.0
    %96 = vmatprep.subr.mxu0 0.0
    %97 = vmatpush1.msra.mxu0 0.0
    %98 = vmatprep.subr.mxu0 0.0
    %99 = vmatpush1.msra.mxu0 0.0
    %100 = vmatprep.subr.mxu0 0.0
    %101 = vmatpush1.msra.mxu0 0.0
    %102 = vmatprep.subr.mxu0 0.0
    %103 = vmatpush1.msra.mxu0 0.0
    %104 = vmatprep.subr.mxu0 0.0
    %105 = vmatpush1.msra.mxu0 0.0
    %106 = vmatprep.subr.mxu0 0.0
    %107 = vmatpush1.msra.mxu0 0.0
    %108 = vmatprep.subr.mxu0 0.0
    %109 = vmatpush1.msra.mxu0 0.0
    %110 = vmatprep.subr.mxu0 0.0
    %111 = vmatpush1.msra.mxu0 0.0
    %112 = vmatprep.subr.mxu0 0.0
    %113 = vmatpush1.msra.mxu0 0.0
    %114 = vmatprep.subr.mxu0 0.0
    %115 = vmatpush1.msra.mxu0 0.0
    %116 = vmatprep.subr.mxu0 0.0
    %117 = vmatpush1.msra.mxu0 0.0
    %118 = vmatprep.subr.mxu0 0.0
    %119 = vmatpush1.msra.mxu0 0.0
    %120 = vmatprep.subr.mxu0 0.0
    %121 = vmatpush1.msra.mxu0 0.0
    %122 = vmatprep.subr.mxu0 0.0
    %123 = vmatpush1.msra.mxu0 0.0
    %124 = vmatprep.subr.mxu0 0.0
    %125 = vmatpush1.msra.mxu0 0.0
    %126 = vmatprep.subr.mxu0 0.0
    %127 = vmatpush1.msra.mxu0 0.0
    %128 = vmatprep.mubr.f32.mxu0 0.0
    %129 = vmatmul.mubr.f32.gmra.mrb[0].mxu0 %v59
    %v130 = vpop.f32.mrb[0].mxu0
    %v131 = vadd.f32 0.0, %v130
    %v132 = vpop.f32.mrb[0].mxu0
    %133 = vmatprep.mubr.f32.mxu0 0.0
    %134 = vmatmul.mubr.f32.gmra.mrb[0].mxu0 %v62
    %v135 = vpop.f32.mrb[0].mxu0
    %v136 = vadd.f32 0.0, %v135
    %v137 = vpop.f32.mrb[0].mxu0
    %138 = vdwg.mxu0
    %v139 = vld [vmem:[%s1] sm:$0x1]
    %v140 = vlaneseq
    %v141 = vshrl.u32 %v140, 7
    %v142 = vsub.s32 0, %v141
    %v143 = vrot.slane %v139, %v142
    %vm144 = vcmp.eq.s32.totalorder %v44, %v143
    %vm145 = vcmp.eq.s32.totalorder %v45, %v143
    %v146 = vsel %vm144, 1, 0
    %v147 = vsel %vm145, 1, 0
    %v148 = vcvt.s32.f32 %v146
    %v149 = vcvt.s32.f32 %v147
    %v150 = vmul.f32 %v131, %v148
    %v151 = vmul.f32 %v136, %v149
    %v152 = vadd.f32 %v150, %v151
    %v153 = vrot.slane %v152, 4
    %v154 = vadd.f32 %v152, %v153
    %v155 = vrot.slane %v154, 2
    %v156 = vadd.f32 %v154, %v155
    %v157 = vrot.slane %v156, 1
    %v158 = vadd.f32 %v156, %v157
    %159 = vst [vmem:[#allocation7] sm:$0x1] %v158
    // Predicated region
    $region22: #{tpu_custom_call.1} parent=1 // pred_check
      _
    $region23: #{tpu_custom_call.1} parent=1 // pred_check_branch
      %161 = sbr.rel (0) target = $region25
    $region24: #{tpu_custom_call.1} parent=1 // pred_region
      %s163 = ssub.s32 16, 16
      %164 = vsyncadd [#allocation4], %s163
      %s166 = sshll.u32 [#allocation7], 4
      %s167 = int_to_ptr.vmem [resolvable:$true] %s166
      %169 = dma.vmem_to_hbm [thread:$0]  %s167, 16, %s3, [#allocation4]
    $region25: #{tpu_custom_call.1} parent=1 // pred_fallthru
      _
    // Predicated region
    $region26: #{tpu_custom_call.1} parent=1 // pred_check
      _
    $region27: #{tpu_custom_call.1} parent=1 // pred_check_branch
      %171 = sbr.rel (0) target = $region29
    $region28: #{tpu_custom_call.1} parent=1 // pred_region
      %172 = dma.done [#allocation4], 16
    $region29: #{tpu_custom_call.1} parent=1 // pred_fallthru
      _
    %173 = vsyncpa [#allocation3], 1
    %174 = vsyncpa [#allocation6], 1
    %175 = vsyncpa [#allocation4], 1

</llo_original>
